<compile_context>
chip_gen: v6e
topology: v6e:2x2x1
jax: 0.10.0
libtpu: 0.0.40
codegen_flags: <defaults>
</compile_context>

<pallas_src>
import functools
import random

import jax
import jax.numpy as jnp
from jax.experimental import pallas as pl
from jax.experimental.pallas import tpu as pltpu

# TverskyLoss hyper-params from total_loss.__init__ (alpha=0.1, beta=0.9, do_bg=False)
# TODO(synk): TverskyLoss source not given; assuming nnUNet defaults
#             (softmax nonlin, batch_dice=False, smooth=1.0, square=False, loss = -mean).
TV_ALPHA = 0.1
TV_BETA = 0.9
TV_SMOOTH = 1.0


def _loss_kernel(beta, main_ref, aux_ref, tgt_ref, tv_ref, kl_ref):
    """Per (batch, pixel-tile) kernel.

    main_ref, aux_ref : (C, TP) logits (any float dtype)
    tgt_ref           : (1, TP) int ground-truth labels
    tv_ref            : (C, 8) f32 accumulated Tversky stats
                        [tp_main, sum_p_main, tp_aux, sum_p_aux, class_count, ...]
    kl_ref            : (1, 8) f32 accumulated KL_CE stats
                        [sum(ce*ev), sum(ev), sum(var)] x 2 directions, then pad
    """
    pt = pl.program_id(1)

    @pl.when(pt == 0)
    def _init():
        tv_ref[...] = jnp.zeros_like(tv_ref)
        kl_ref[...] = jnp.zeros_like(kl_ref)

    m = main_ref[...].astype(jnp.float32)
    a = aux_ref[...].astype(jnp.float32)
    t = tgt_ref[...].astype(jnp.int32)                 # (1, TP)
    C, TP = m.shape

    # ---- fused softmax / log-softmax over the channel (sublane) axis -----------
    def softmax_pair(x):
        shifted = x - jnp.max(x, axis=0, keepdims=True)
        e = jnp.exp(shifted)                           # single exp per element
        s = jnp.sum(e, axis=0, keepdims=True)          # (1, TP)
        soft = e * (1.0 / s)                           # exact recip (accuracy)
        log_soft = shifted - jnp.log(s)
        return soft, log_soft

    m_soft, log_sm_m = softmax_pair(m)
    a_soft, log_sm_a = softmax_pair(a)

    ch_idx = jax.lax.broadcasted_iota(jnp.int32, (C, TP), 0)

    # ---- Tversky raw stats (one-hot ground truth over channels) ----------------
    # fp / fn are derived in the wrapper as sum_p - tp and class_count - tp.
    y1h = (ch_idx == t).astype(jnp.float32)            # (C, TP)
    tv_ref[:, 0:1] += jnp.sum(m_soft * y1h, axis=1, keepdims=True)   # tp_main
    tv_ref[:, 1:2] += jnp.sum(m_soft, axis=1, keepdims=True)         # sum_p_main
    tv_ref[:, 2:3] += jnp.sum(a_soft * y1h, axis=1, keepdims=True)   # tp_aux
    tv_ref[:, 3:4] += jnp.sum(a_soft, axis=1, keepdims=True)         # sum_p_aux
    tv_ref[:, 4:5] += jnp.sum(y1h, axis=1, keepdims=True)            # class_count

    # ---- pseudo soft label: only row 0 is consumed by the CE target ------------
    # mix is a convex combination of probabilities, so mix in [0, 1] and exp(mix)
    # is safe without subtracting the channel max (identical value in exact math).
    mix = beta * m_soft + (1.0 - beta) * a_soft
    e_mix = jnp.exp(mix)
    denom = jnp.sum(e_mix, axis=0, keepdims=True)      # (1, TP)
    pseudo0 = e_mix[0:1, :] * pl.reciprocal(denom, approx=True)
    # CE target = pseudo_label_soft[:, 0].long() (truncation toward zero); kept
    # faithful to the original module even though it is ~always class 0.
    ce_tgt = pseudo0.astype(jnp.int32)                 # (1, TP)
    sel_ce = ch_idx == ce_tgt                          # shared by both directions

    # ---- KL_CE statistics, both directions --------------------------------------
    def kl_ce_stats(log_sm_pred, soft_other, log_sm_other):
        ce = -jnp.sum(jnp.where(sel_ce, log_sm_pred, 0.0),
                      axis=0, keepdims=True)                          # (1, TP)
        var = jnp.sum(soft_other * (log_sm_other - log_sm_pred),
                      axis=0, keepdims=True)                          # (1, TP)
        ev = jnp.exp(-var)
        return (jnp.sum(ce * ev, keepdims=True),
                jnp.sum(ev, keepdims=True),
                jnp.sum(var, keepdims=True))

    cev1, ev1, var1 = kl_ce_stats(log_sm_m, a_soft, log_sm_a)  # KL_CE(main, aux)
    cev2, ev2, var2 = kl_ce_stats(log_sm_a, m_soft, log_sm_m)  # KL_CE(aux, main)
    kl_ref[0:1, 0:1] += cev1
    kl_ref[0:1, 1:2] += ev1
    kl_ref[0:1, 2:3] += var1
    kl_ref[0:1, 3:4] += cev2
    kl_ref[0:1, 4:5] += ev2
    kl_ref[0:1, 5:6] += var2


def _choose_pixel_tile(P, max_tp=8192):
    """Largest multiple of 128 that divides P, capped at max_tp (fallback: P)."""
    if P % 128 != 0:
        return P                     # tiny / irregular spatial sizes: single tile
    tp = (min(P, max_tp) // 128) * 128
    while tp >= 128:
        if P % tp == 0:
            return tp
        tp -= 128
    return P


def total_loss(net_main, net_aux, target, beta, *, max_pixel_tile=8192):
    """net_main, net_aux: (B, C, H, W) logits; target: (B, 1, H, W) int labels."""
    B, C, H, W = net_main.shape
    P = H * W
    TP = _choose_pixel_tile(P, max_pixel_tile)
    n_p = P // TP

    # No wrapper-side dtype casts: logits stay in their native dtype (bf16 ok);
    # the kernel up-casts to f32 internally.
    m = net_main.reshape(B, C, P)
    a = net_aux.reshape(B, C, P)
    t = target.reshape(B, 1, P)

    kernel = functools.partial(_loss_kernel, float(beta))

    # NOTE(v5e): if DMA is still exposed after tiling, add
    #   pipeline_mode=pl.Buffered(3) on the two logits BlockSpecs.
    tv, kl = pl.pallas_call(
        kernel,
        out_shape=(jax.ShapeDtypeStruct((B, C, 8), jnp.float32),
                   jax.ShapeDtypeStruct((B, 1, 8), jnp.float32)),
        grid_spec=pltpu.PrefetchScalarGridSpec(
            num_scalar_prefetch=0,
            grid=(B, n_p),
            in_specs=[pl.BlockSpec((None, C, TP), lambda b, p: (b, 0, p)),
                      pl.BlockSpec((None, C, TP), lambda b, p: (b, 0, p)),
                      pl.BlockSpec((None, 1, TP), lambda b, p: (b, 0, p))],
            out_specs=[pl.BlockSpec((None, C, 8), lambda b, p: (b, 0, 0)),
                       pl.BlockSpec((None, 1, 8), lambda b, p: (b, 0, 0))]),
        compiler_params=pltpu.CompilerParams(
            dimension_semantics=("parallel", "arbitrary"),
            vmem_limit_bytes=32 * 1024 * 1024),
    )(m, a, t)

    # ---- Tversky finalization (tiny (B, C) scalar work) --------------------------
    tp_m, sp_m, tp_a, sp_a, cc = (tv[..., i] for i in range(5))

    def tversky_index(tp, sp):
        fp = sp - tp
        fn = cc - tp
        return (tp + TV_SMOOTH) / (tp + TV_ALPHA * fp + TV_BETA * fn + TV_SMOOTH)

    main_sce_loss = -jnp.mean(tversky_index(tp_m, sp_m)[:, 1:])    # do_bg=False
    aux_sce_loss = -jnp.mean(tversky_index(tp_a, sp_a)[:, 1:])
    loss_by_label = 0.5 * (main_sce_loss + aux_sce_loss)

    # ---- KL_CE finalization: global (over B*H*W) ratios / mean -------------------
    kl = kl.reshape(B, 8)
    n_pix = float(B * P)
    loss1 = jnp.sum(kl[:, 0]) / jnp.sum(kl[:, 1]) + jnp.sum(kl[:, 2]) / n_pix
    loss2 = jnp.sum(kl[:, 3]) / jnp.sum(kl[:, 4]) + jnp.sum(kl[:, 5]) / n_pix
    loss_pseudo_label = 0.5 * (loss1 + loss2)

    return loss_by_label + loss_pseudo_label


def _reference_total_loss(net_main, net_aux, target, beta):
    """Pure-JAX reference mirroring the PyTorch module (for validation)."""
    B, C, H, W = net_main.shape
    m = net_main.astype(jnp.float32)
    a = net_aux.astype(jnp.float32)
    lbl = target[:, 0].astype(jnp.int32)                      # (B, H, W)
    y1h = jax.nn.one_hot(lbl, C, axis=1, dtype=jnp.float32)   # (B, C, H, W)

    def tversky_loss(x):
        p = jax.nn.softmax(x, axis=1)
        tp = jnp.sum(p * y1h, axis=(2, 3))
        fp = jnp.sum(p * (1 - y1h), axis=(2, 3))
        fn = jnp.sum((1 - p) * y1h, axis=(2, 3))
        tv = (tp + TV_SMOOTH) / (tp + TV_ALPHA * fp + TV_BETA * fn + TV_SMOOTH)
        return -jnp.mean(tv[:, 1:])

    loss_by_label = 0.5 * (tversky_loss(m) + tversky_loss(a))

    m_soft = jax.nn.softmax(m, axis=1)
    a_soft = jax.nn.softmax(a, axis=1)
    pseudo = jax.nn.softmax(beta * m_soft + (1.0 - beta) * a_soft, axis=1)
    ce_tgt = pseudo[:, 0].astype(jnp.int32)                   # (B, H, W)

    def kl_ce(pred_main, pred_aux):
        lsm_m = jax.nn.log_softmax(pred_main, axis=1)
        lsm_a = jax.nn.log_softmax(pred_aux, axis=1)
        sm_a = jnp.exp(lsm_a)
        ce = -jnp.take_along_axis(lsm_m, ce_tgt[:, None], axis=1)[:, 0]
        var = jnp.sum(sm_a * (lsm_a - lsm_m), axis=1)
        ev = jnp.exp(-var)
        return jnp.sum(ce * ev) / jnp.sum(ev) + jnp.mean(var)

    loss_pseudo_label = 0.5 * (kl_ce(m, a) + kl_ce(a, m))
    return loss_by_label + loss_pseudo_label


if __name__ == "__main__":
    B, C, H, W = 2, 4, 16, 16
    key = jax.random.PRNGKey(0)
    k1, k2, k3 = jax.random.split(key, 3)
    net_main = jax.random.normal(k1, (B, C, H, W), dtype=jnp.float32)
    net_aux = jax.random.normal(k2, (B, C, H, W), dtype=jnp.float32)
    target = jax.random.randint(k3, (B, 1, H, W), 0, C, dtype=jnp.int32)

    random.seed(0)
    beta = random.random() + 1e-10   # deterministic stand-in for random.random()

    ref = jax.block_until_ready(_reference_total_loss(net_main, net_aux, target, beta))

    # Default tiling (single pixel tile at this toy size).
    loss = jax.block_until_ready(total_loss(net_main, net_aux, target, beta))
    assert jnp.allclose(loss, ref, rtol=1e-4, atol=1e-5), (loss, ref)

    # Force multiple pixel tiles to exercise the cross-tile accumulator path.
    loss_tiled = jax.block_until_ready(
        total_loss(net_main, net_aux, target, beta, max_pixel_tile=128))
    assert jnp.allclose(loss_tiled, ref, rtol=1e-4, atol=1e-5), (loss_tiled, ref)

    print("KERNEL_OK")
</pallas_src>

<mosaic_0001>
module attributes {stable_mosaic.version = 11 : i64} {
  func.func @_loss_kernel(%arg0: i32, %arg1: i32, %arg2: memref<1x4x256xf32, #tpu.memory_space<vmem>>, %arg3: memref<1x4x256xf32, #tpu.memory_space<vmem>>, %arg4: memref<1x1x256xi32, #tpu.memory_space<vmem>>, %arg5: memref<1x4x8xf32, #tpu.memory_space<vmem>>, %arg6: memref<1x1x8xf32, #tpu.memory_space<vmem>>) attributes {dimension_semantics = [#tpu.dimension_semantics<parallel>, #tpu.dimension_semantics<arbitrary>], iteration_bounds = array<i64: 2, 1>, scalar_prefetch = 0 : i64, scratch_operands = 0 : i64, tpu.core_type = #tpu.core_type<tc>, window_params = [{transform_indices = @transform_0, window_bounds = array<i64: 1, 4, 256>}, {transform_indices = @transform_1, window_bounds = array<i64: 1, 4, 256>}, {transform_indices = @transform_2, window_bounds = array<i64: 1, 1, 256>}, {transform_indices = @transform_3, window_bounds = array<i64: 1, 4, 8>}, {transform_indices = @transform_4, window_bounds = array<i64: 1, 1, 8>}]} {
    %c0_i32 = arith.constant 0 : i32
    %0 = arith.cmpi eq, %arg1, %c0_i32 : i32
    %1 = arith.extui %0 : i1 to i32
    %c0_i32_0 = arith.constant 0 : i32
    %2 = arith.cmpi ne, %1, %c0_i32_0 : i32
    scf.if %2 {
      %cst_99 = arith.constant 0.000000e+00 : f32
      %192 = vector.broadcast %cst_99 : f32 to vector<4x8xf32>
      %c0_100 = arith.constant 0 : index
      %c0_101 = arith.constant 0 : index
      %c0_102 = arith.constant 0 : index
      %193 = vector.load %arg5[%c0_100, %c0_101, %c0_102] : memref<1x4x8xf32, #tpu.memory_space<vmem>>, vector<1x4x8xf32>
      %194 = vector.shape_cast %193 : vector<1x4x8xf32> to vector<4x8xf32>
      %195 = vector.shape_cast %192 : vector<4x8xf32> to vector<1x4x8xf32>
      tpu.vector_store %arg5[%c0_100, %c0_101, %c0_102], %195 {strides = array<i32>} : memref<1x4x8xf32, #tpu.memory_space<vmem>>, vector<1x4x8xf32>,
      %cst_103 = arith.constant 0.000000e+00 : f32
      %196 = vector.broadcast %cst_103 : f32 to vector<1x8xf32>
      %c0_104 = arith.constant 0 : index
      %c0_105 = arith.constant 0 : index
      %c0_106 = arith.constant 0 : index
      %197 = vector.load %arg6[%c0_104, %c0_105, %c0_106] : memref<1x1x8xf32, #tpu.memory_space<vmem>>, vector<1x1x8xf32>
      %198 = vector.shape_cast %197 : vector<1x1x8xf32> to vector<1x8xf32>
      %199 = vector.shape_cast %196 : vector<1x8xf32> to vector<1x1x8xf32>
      tpu.vector_store %arg6[%c0_104, %c0_105, %c0_106], %199 {strides = array<i32>} : memref<1x1x8xf32, #tpu.memory_space<vmem>>, vector<1x1x8xf32>,
    } else {
    }
    %c0 = arith.constant 0 : index
    %c0_1 = arith.constant 0 : index
    %c0_2 = arith.constant 0 : index
    %3 = vector.load %arg2[%c0, %c0_1, %c0_2] : memref<1x4x256xf32, #tpu.memory_space<vmem>>, vector<1x4x256xf32>
    %4 = vector.shape_cast %3 : vector<1x4x256xf32> to vector<4x256xf32>
    %c0_3 = arith.constant 0 : index
    %c0_4 = arith.constant 0 : index
    %c0_5 = arith.constant 0 : index
    %5 = vector.load %arg3[%c0_3, %c0_4, %c0_5] : memref<1x4x256xf32, #tpu.memory_space<vmem>>, vector<1x4x256xf32>
    %6 = vector.shape_cast %5 : vector<1x4x256xf32> to vector<4x256xf32>
    %c0_6 = arith.constant 0 : index
    %c0_7 = arith.constant 0 : index
    %c0_8 = arith.constant 0 : index
    %7 = vector.load %arg4[%c0_6, %c0_7, %c0_8] : memref<1x1x256xi32, #tpu.memory_space<vmem>>, vector<1x1x256xi32>
    %8 = vector.shape_cast %7 : vector<1x1x256xi32> to vector<1x256xi32>
    %cst = arith.constant dense<0xFF800000> : vector<256xf32>
    %9 = vector.multi_reduction <maximumf>, %4, %cst [0] : vector<4x256xf32> to vector<256xf32>
    %10 = vector.shape_cast %9 : vector<256xf32> to vector<1x256xf32>
    %11 = vector.broadcast %10 : vector<1x256xf32> to vector<4x256xf32>
    %12 = arith.subf %4, %11 : vector<4x256xf32>
    %13 = math.exp %12 : vector<4x256xf32>
    %cst_9 = arith.constant dense<0.000000e+00> : vector<256xf32>
    %14 = vector.multi_reduction <add>, %13, %cst_9 [0] : vector<4x256xf32> to vector<256xf32>
    %15 = vector.shape_cast %14 : vector<256xf32> to vector<1x256xf32>
    %cst_10 = arith.constant 1.000000e+00 : f32
    %16 = vector.broadcast %cst_10 : f32 to vector<1x256xf32>
    %17 = arith.divf %16, %15 : vector<1x256xf32>
    %18 = vector.broadcast %17 : vector<1x256xf32> to vector<4x256xf32>
    %19 = arith.mulf %13, %18 : vector<4x256xf32>
    %20 = math.log %15 : vector<1x256xf32>
    %21 = vector.broadcast %20 : vector<1x256xf32> to vector<4x256xf32>
    %22 = arith.subf %12, %21 : vector<4x256xf32>
    %cst_11 = arith.constant dense<0xFF800000> : vector<256xf32>
    %23 = vector.multi_reduction <maximumf>, %6, %cst_11 [0] : vector<4x256xf32> to vector<256xf32>
    %24 = vector.shape_cast %23 : vector<256xf32> to vector<1x256xf32>
    %25 = vector.broadcast %24 : vector<1x256xf32> to vector<4x256xf32>
    %26 = arith.subf %6, %25 : vector<4x256xf32>
    %27 = math.exp %26 : vector<4x256xf32>
    %cst_12 = arith.constant dense<0.000000e+00> : vector<256xf32>
    %28 = vector.multi_reduction <add>, %27, %cst_12 [0] : vector<4x256xf32> to vector<256xf32>
    %29 = vector.shape_cast %28 : vector<256xf32> to vector<1x256xf32>
    %cst_13 = arith.constant 1.000000e+00 : f32
    %30 = vector.broadcast %cst_13 : f32 to vector<1x256xf32>
    %31 = arith.divf %30, %29 : vector<1x256xf32>
    %32 = vector.broadcast %31 : vector<1x256xf32> to vector<4x256xf32>
    %33 = arith.mulf %27, %32 : vector<4x256xf32>
    %34 = math.log %29 : vector<1x256xf32>
    %35 = vector.broadcast %34 : vector<1x256xf32> to vector<4x256xf32>
    %36 = arith.subf %26, %35 : vector<4x256xf32>
    %37 = tpu.iota {dimensions = array<i32: 0>} : vector<4x256xi32>
    %38 = vector.broadcast %8 : vector<1x256xi32> to vector<4x256xi32>
    %39 = arith.cmpi eq, %37, %38 : vector<4x256xi32>
    %40 = arith.extui %39 : vector<4x256xi1> to vector<4x256xi32>
    %41 = arith.sitofp %40 : vector<4x256xi32> to vector<4x256xf32>
    %c0_14 = arith.constant 0 : index
    %c0_15 = arith.constant 0 : index
    %c0_16 = arith.constant 0 : index
    %42 = vector.load %arg5[%c0_14, %c0_15, %c0_16] : memref<1x4x8xf32, #tpu.memory_space<vmem>>, vector<1x4x1xf32>
    %43 = vector.shape_cast %42 : vector<1x4x1xf32> to vector<4x1xf32>
    %44 = arith.mulf %19, %41 : vector<4x256xf32>
    %cst_17 = arith.constant dense<0.000000e+00> : vector<4xf32>
    %45 = vector.multi_reduction <add>, %44, %cst_17 [1] : vector<4x256xf32> to vector<4xf32>
    %46 = vector.shape_cast %45 : vector<4xf32> to vector<4x1xf32>
    %47 = arith.addf %43, %46 : vector<4x1xf32>
    %c0_18 = arith.constant 0 : index
    %c0_19 = arith.constant 0 : index
    %c0_20 = arith.constant 0 : index
    %48 = vector.load %arg5[%c0_18, %c0_19, %c0_20] : memref<1x4x8xf32, #tpu.memory_space<vmem>>, vector<1x4x1xf32>
    %49 = vector.shape_cast %48 : vector<1x4x1xf32> to vector<4x1xf32>
    %50 = vector.shape_cast %47 : vector<4x1xf32> to vector<1x4x1xf32>
    tpu.vector_store %arg5[%c0_18, %c0_19, %c0_20], %50 {strides = array<i32>} : memref<1x4x8xf32, #tpu.memory_space<vmem>>, vector<1x4x1xf32>,
    %c0_21 = arith.constant 0 : index
    %c0_22 = arith.constant 0 : index
    %c1 = arith.constant 1 : index
    %51 = vector.load %arg5[%c0_21, %c0_22, %c1] : memref<1x4x8xf32, #tpu.memory_space<vmem>>, vector<1x4x1xf32>
    %52 = vector.shape_cast %51 : vector<1x4x1xf32> to vector<4x1xf32>
    %cst_23 = arith.constant dense<0.000000e+00> : vector<4xf32>
    %53 = vector.multi_reduction <add>, %19, %cst_23 [1] : vector<4x256xf32> to vector<4xf32>
    %54 = vector.shape_cast %53 : vector<4xf32> to vector<4x1xf32>
    %55 = arith.addf %52, %54 : vector<4x1xf32>
    %c0_24 = arith.constant 0 : index
    %c0_25 = arith.constant 0 : index
    %c1_26 = arith.constant 1 : index
    %56 = vector.load %arg5[%c0_24, %c0_25, %c1_26] : memref<1x4x8xf32, #tpu.memory_space<vmem>>, vector<1x4x1xf32>
    %57 = vector.shape_cast %56 : vector<1x4x1xf32> to vector<4x1xf32>
    %58 = vector.shape_cast %55 : vector<4x1xf32> to vector<1x4x1xf32>
    tpu.vector_store %arg5[%c0_24, %c0_25, %c1_26], %58 {strides = array<i32>} : memref<1x4x8xf32, #tpu.memory_space<vmem>>, vector<1x4x1xf32>,
    %c0_27 = arith.constant 0 : index
    %c0_28 = arith.constant 0 : index
    %c2 = arith.constant 2 : index
    %59 = vector.load %arg5[%c0_27, %c0_28, %c2] : memref<1x4x8xf32, #tpu.memory_space<vmem>>, vector<1x4x1xf32>
    %60 = vector.shape_cast %59 : vector<1x4x1xf32> to vector<4x1xf32>
    %61 = arith.mulf %33, %41 : vector<4x256xf32>
    %cst_29 = arith.constant dense<0.000000e+00> : vector<4xf32>
    %62 = vector.multi_reduction <add>, %61, %cst_29 [1] : vector<4x256xf32> to vector<4xf32>
    %63 = vector.shape_cast %62 : vector<4xf32> to vector<4x1xf32>
    %64 = arith.addf %60, %63 : vector<4x1xf32>
    %c0_30 = arith.constant 0 : index
    %c0_31 = arith.constant 0 : index
    %c2_32 = arith.constant 2 : index
    %65 = vector.load %arg5[%c0_30, %c0_31, %c2_32] : memref<1x4x8xf32, #tpu.memory_space<vmem>>, vector<1x4x1xf32>
    %66 = vector.shape_cast %65 : vector<1x4x1xf32> to vector<4x1xf32>
    %67 = vector.shape_cast %64 : vector<4x1xf32> to vector<1x4x1xf32>
    tpu.vector_store %arg5[%c0_30, %c0_31, %c2_32], %67 {strides = array<i32>} : memref<1x4x8xf32, #tpu.memory_space<vmem>>, vector<1x4x1xf32>,
    %c0_33 = arith.constant 0 : index
    %c0_34 = arith.constant 0 : index
    %c3 = arith.constant 3 : index
    %68 = vector.load %arg5[%c0_33, %c0_34, %c3] : memref<1x4x8xf32, #tpu.memory_space<vmem>>, vector<1x4x1xf32>
    %69 = vector.shape_cast %68 : vector<1x4x1xf32> to vector<4x1xf32>
    %cst_35 = arith.constant dense<0.000000e+00> : vector<4xf32>
    %70 = vector.multi_reduction <add>, %33, %cst_35 [1] : vector<4x256xf32> to vector<4xf32>
    %71 = vector.shape_cast %70 : vector<4xf32> to vector<4x1xf32>
    %72 = arith.addf %69, %71 : vector<4x1xf32>
    %c0_36 = arith.constant 0 : index
    %c0_37 = arith.constant 0 : index
    %c3_38 = arith.constant 3 : index
    %73 = vector.load %arg5[%c0_36, %c0_37, %c3_38] : memref<1x4x8xf32, #tpu.memory_space<vmem>>, vector<1x4x1xf32>
    %74 = vector.shape_cast %73 : vector<1x4x1xf32> to vector<4x1xf32>
    %75 = vector.shape_cast %72 : vector<4x1xf32> to vector<1x4x1xf32>
    tpu.vector_store %arg5[%c0_36, %c0_37, %c3_38], %75 {strides = array<i32>} : memref<1x4x8xf32, #tpu.memory_space<vmem>>, vector<1x4x1xf32>,
    %c0_39 = arith.constant 0 : index
    %c0_40 = arith.constant 0 : index
    %c4 = arith.constant 4 : index
    %76 = vector.load %arg5[%c0_39, %c0_40, %c4] : memref<1x4x8xf32, #tpu.memory_space<vmem>>, vector<1x4x1xf32>
    %77 = vector.shape_cast %76 : vector<1x4x1xf32> to vector<4x1xf32>
    %cst_41 = arith.constant dense<0.000000e+00> : vector<4xf32>
    %78 = vector.multi_reduction <add>, %41, %cst_41 [1] : vector<4x256xf32> to vector<4xf32>
    %79 = vector.shape_cast %78 : vector<4xf32> to vector<4x1xf32>
    %80 = arith.addf %77, %79 : vector<4x1xf32>
    %c0_42 = arith.constant 0 : index
    %c0_43 = arith.constant 0 : index
    %c4_44 = arith.constant 4 : index
    %81 = vector.load %arg5[%c0_42, %c0_43, %c4_44] : memref<1x4x8xf32, #tpu.memory_space<vmem>>, vector<1x4x1xf32>
    %82 = vector.shape_cast %81 : vector<1x4x1xf32> to vector<4x1xf32>
    %83 = vector.shape_cast %80 : vector<4x1xf32> to vector<1x4x1xf32>
    tpu.vector_store %arg5[%c0_42, %c0_43, %c4_44], %83 {strides = array<i32>} : memref<1x4x8xf32, #tpu.memory_space<vmem>>, vector<1x4x1xf32>,
    %cst_45 = arith.constant 0.844421863 : f32
    %84 = vector.broadcast %cst_45 : f32 to vector<4x256xf32>
    %85 = arith.mulf %84, %19 : vector<4x256xf32>
    %cst_46 = arith.constant 0.155578151 : f32
    %86 = vector.broadcast %cst_46 : f32 to vector<4x256xf32>
    %87 = arith.mulf %86, %33 : vector<4x256xf32>
    %88 = arith.addf %85, %87 : vector<4x256xf32>
    %89 = math.exp %88 : vector<4x256xf32>
    %cst_47 = arith.constant dense<0.000000e+00> : vector<256xf32>
    %90 = vector.multi_reduction <add>, %89, %cst_47 [0] : vector<4x256xf32> to vector<256xf32>
    %91 = vector.shape_cast %90 : vector<256xf32> to vector<1x256xf32>
    %92 = vector.extract_strided_slice %89 {offsets = [0, 0], sizes = [1, 256], strides = [1, 1]} : vector<4x256xf32> to vector<1x256xf32>
    %93 = tpu.reciprocal %91 {approx = true} : vector<1x256xf32> -> vector<1x256xf32>
    %94 = arith.mulf %92, %93 : vector<1x256xf32>
    %95 = arith.fptosi %94 : vector<1x256xf32> to vector<1x256xi32>
    %96 = vector.broadcast %95 : vector<1x256xi32> to vector<4x256xi32>
    %97 = arith.cmpi eq, %37, %96 : vector<4x256xi32>
    %cst_48 = arith.constant 0.000000e+00 : f32
    %98 = vector.broadcast %cst_48 : f32 to vector<4x256xf32>
    %99 = arith.select %97, %22, %98 : vector<4x256xi1>, vector<4x256xf32>
    %cst_49 = arith.constant dense<0.000000e+00> : vector<256xf32>
    %100 = vector.multi_reduction <add>, %99, %cst_49 [0] : vector<4x256xf32> to vector<256xf32>
    %101 = vector.shape_cast %100 : vector<256xf32> to vector<1x256xf32>
    %cst_50 = arith.constant 0.000000e+00 : f32
    %102 = vector.broadcast %cst_50 : f32 to vector<1x256xf32>
    %103 = arith.subf %102, %101 : vector<1x256xf32>
    %104 = arith.subf %36, %22 : vector<4x256xf32>
    %105 = arith.mulf %33, %104 : vector<4x256xf32>
    %cst_51 = arith.constant dense<0.000000e+00> : vector<256xf32>
    %106 = vector.multi_reduction <add>, %105, %cst_51 [0] : vector<4x256xf32> to vector<256xf32>
    %107 = vector.shape_cast %106 : vector<256xf32> to vector<1x256xf32>
    %cst_52 = arith.constant 0.000000e+00 : f32
    %108 = vector.broadcast %cst_52 : f32 to vector<1x256xf32>
    %109 = arith.subf %108, %107 : vector<1x256xf32>
    %110 = math.exp %109 : vector<1x256xf32>
    %111 = arith.mulf %103, %110 : vector<1x256xf32>
    %112 = vector.shape_cast %111 : vector<1x256xf32> to vector<1x1x256xf32>
    %cst_53 = arith.constant dense<0.000000e+00> : vector<1xf32>
    %113 = vector.multi_reduction <add>, %112, %cst_53 [1, 2] : vector<1x1x256xf32> to vector<1xf32>
    %114 = vector.shape_cast %113 : vector<1xf32> to vector<1x1x1xf32>
    %115 = vector.extract %114[0, 0, 0] : f32 from vector<1x1x1xf32>
    %116 = vector.broadcast %115 : f32 to vector<1x1xf32>
    %117 = vector.shape_cast %110 : vector<1x256xf32> to vector<1x1x256xf32>
    %cst_54 = arith.constant dense<0.000000e+00> : vector<1xf32>
    %118 = vector.multi_reduction <add>, %117, %cst_54 [1, 2] : vector<1x1x256xf32> to vector<1xf32>
    %119 = vector.shape_cast %118 : vector<1xf32> to vector<1x1x1xf32>
    %120 = vector.extract %119[0, 0, 0] : f32 from vector<1x1x1xf32>
    %121 = vector.broadcast %120 : f32 to vector<1x1xf32>
    %122 = vector.shape_cast %107 : vector<1x256xf32> to vector<1x1x256xf32>
    %cst_55 = arith.constant dense<0.000000e+00> : vector<1xf32>
    %123 = vector.multi_reduction <add>, %122, %cst_55 [1, 2] : vector<1x1x256xf32> to vector<1xf32>
    %124 = vector.shape_cast %123 : vector<1xf32> to vector<1x1x1xf32>
    %125 = vector.extract %124[0, 0, 0] : f32 from vector<1x1x1xf32>
    %126 = vector.broadcast %125 : f32 to vector<1x1xf32>
    %cst_56 = arith.constant 0.000000e+00 : f32
    %127 = vector.broadcast %cst_56 : f32 to vector<4x256xf32>
    %128 = arith.select %97, %36, %127 : vector<4x256xi1>, vector<4x256xf32>
    %cst_57 = arith.constant dense<0.000000e+00> : vector<256xf32>
    %129 = vector.multi_reduction <add>, %128, %cst_57 [0] : vector<4x256xf32> to vector<256xf32>
    %130 = vector.shape_cast %129 : vector<256xf32> to vector<1x256xf32>
    %cst_58 = arith.constant 0.000000e+00 : f32
    %131 = vector.broadcast %cst_58 : f32 to vector<1x256xf32>
    %132 = arith.subf %131, %130 : vector<1x256xf32>
    %133 = arith.subf %22, %36 : vector<4x256xf32>
    %134 = arith.mulf %19, %133 : vector<4x256xf32>
    %cst_59 = arith.constant dense<0.000000e+00> : vector<256xf32>
    %135 = vector.multi_reduction <add>, %134, %cst_59 [0] : vector<4x256xf32> to vector<256xf32>
    %136 = vector.shape_cast %135 : vector<256xf32> to vector<1x256xf32>
    %cst_60 = arith.constant 0.000000e+00 : f32
    %137 = vector.broadcast %cst_60 : f32 to vector<1x256xf32>
    %138 = arith.subf %137, %136 : vector<1x256xf32>
    %139 = math.exp %138 : vector<1x256xf32>
    %140 = arith.mulf %132, %139 : vector<1x256xf32>
    %141 = vector.shape_cast %140 : vector<1x256xf32> to vector<1x1x256xf32>
    %cst_61 = arith.constant dense<0.000000e+00> : vector<1xf32>
    %142 = vector.multi_reduction <add>, %141, %cst_61 [1, 2] : vector<1x1x256xf32> to vector<1xf32>
    %143 = vector.shape_cast %142 : vector<1xf32> to vector<1x1x1xf32>
    %144 = vector.extract %143[0, 0, 0] : f32 from vector<1x1x1xf32>
    %145 = vector.broadcast %144 : f32 to vector<1x1xf32>
    %146 = vector.shape_cast %139 : vector<1x256xf32> to vector<1x1x256xf32>
    %cst_62 = arith.constant dense<0.000000e+00> : vector<1xf32>
    %147 = vector.multi_reduction <add>, %146, %cst_62 [1, 2] : vector<1x1x256xf32> to vector<1xf32>
    %148 = vector.shape_cast %147 : vector<1xf32> to vector<1x1x1xf32>
    %149 = vector.extract %148[0, 0, 0] : f32 from vector<1x1x1xf32>
    %150 = vector.broadcast %149 : f32 to vector<1x1xf32>
    %151 = vector.shape_cast %136 : vector<1x256xf32> to vector<1x1x256xf32>
    %cst_63 = arith.constant dense<0.000000e+00> : vector<1xf32>
    %152 = vector.multi_reduction <add>, %151, %cst_63 [1, 2] : vector<1x1x256xf32> to vector<1xf32>
    %153 = vector.shape_cast %152 : vector<1xf32> to vector<1x1x1xf32>
    %154 = vector.extract %153[0, 0, 0] : f32 from vector<1x1x1xf32>
    %155 = vector.broadcast %154 : f32 to vector<1x1xf32>
    %c0_64 = arith.constant 0 : index
    %c0_65 = arith.constant 0 : index
    %c0_66 = arith.constant 0 : index
    %156 = vector.load %arg6[%c0_64, %c0_65, %c0_66] : memref<1x1x8xf32, #tpu.memory_space<vmem>>, vector<1x1x1xf32>
    %157 = vector.shape_cast %156 : vector<1x1x1xf32> to vector<1x1xf32>
    %158 = arith.addf %157, %116 : vector<1x1xf32>
    %c0_67 = arith.constant 0 : index
    %c0_68 = arith.constant 0 : index
    %c0_69 = arith.constant 0 : index
    %159 = vector.load %arg6[%c0_67, %c0_68, %c0_69] : memref<1x1x8xf32, #tpu.memory_space<vmem>>, vector<1x1x1xf32>
    %160 = vector.shape_cast %159 : vector<1x1x1xf32> to vector<1x1xf32>
    %161 = vector.shape_cast %158 : vector<1x1xf32> to vector<1x1x1xf32>
    tpu.vector_store %arg6[%c0_67, %c0_68, %c0_69], %161 {strides = array<i32>} : memref<1x1x8xf32, #tpu.memory_space<vmem>>, vector<1x1x1xf32>,
    %c0_70 = arith.constant 0 : index
    %c0_71 = arith.constant 0 : index
    %c1_72 = arith.constant 1 : index
    %162 = vector.load %arg6[%c0_70, %c0_71, %c1_72] : memref<1x1x8xf32, #tpu.memory_space<vmem>>, vector<1x1x1xf32>
    %163 = vector.shape_cast %162 : vector<1x1x1xf32> to vector<1x1xf32>
    %164 = arith.addf %163, %121 : vector<1x1xf32>
    %c0_73 = arith.constant 0 : index
    %c0_74 = arith.constant 0 : index
    %c1_75 = arith.constant 1 : index
    %165 = vector.load %arg6[%c0_73, %c0_74, %c1_75] : memref<1x1x8xf32, #tpu.memory_space<vmem>>, vector<1x1x1xf32>
    %166 = vector.shape_cast %165 : vector<1x1x1xf32> to vector<1x1xf32>
    %167 = vector.shape_cast %164 : vector<1x1xf32> to vector<1x1x1xf32>
    tpu.vector_store %arg6[%c0_73, %c0_74, %c1_75], %167 {strides = array<i32>} : memref<1x1x8xf32, #tpu.memory_space<vmem>>, vector<1x1x1xf32>,
    %c0_76 = arith.constant 0 : index
    %c0_77 = arith.constant 0 : index
    %c2_78 = arith.constant 2 : index
    %168 = vector.load %arg6[%c0_76, %c0_77, %c2_78] : memref<1x1x8xf32, #tpu.memory_space<vmem>>, vector<1x1x1xf32>
    %169 = vector.shape_cast %168 : vector<1x1x1xf32> to vector<1x1xf32>
    %170 = arith.addf %169, %126 : vector<1x1xf32>
    %c0_79 = arith.constant 0 : index
    %c0_80 = arith.constant 0 : index
    %c2_81 = arith.constant 2 : index
    %171 = vector.load %arg6[%c0_79, %c0_80, %c2_81] : memref<1x1x8xf32, #tpu.memory_space<vmem>>, vector<1x1x1xf32>
    %172 = vector.shape_cast %171 : vector<1x1x1xf32> to vector<1x1xf32>
    %173 = vector.shape_cast %170 : vector<1x1xf32> to vector<1x1x1xf32>
    tpu.vector_store %arg6[%c0_79, %c0_80, %c2_81], %173 {strides = array<i32>} : memref<1x1x8xf32, #tpu.memory_space<vmem>>, vector<1x1x1xf32>,
    %c0_82 = arith.constant 0 : index
    %c0_83 = arith.constant 0 : index
    %c3_84 = arith.constant 3 : index
    %174 = vector.load %arg6[%c0_82, %c0_83, %c3_84] : memref<1x1x8xf32, #tpu.memory_space<vmem>>, vector<1x1x1xf32>
    %175 = vector.shape_cast %174 : vector<1x1x1xf32> to vector<1x1xf32>
    %176 = arith.addf %175, %145 : vector<1x1xf32>
    %c0_85 = arith.constant 0 : index
    %c0_86 = arith.constant 0 : index
    %c3_87 = arith.constant 3 : index
    %177 = vector.load %arg6[%c0_85, %c0_86, %c3_87] : memref<1x1x8xf32, #tpu.memory_space<vmem>>, vector<1x1x1xf32>
    %178 = vector.shape_cast %177 : vector<1x1x1xf32> to vector<1x1xf32>
    %179 = vector.shape_cast %176 : vector<1x1xf32> to vector<1x1x1xf32>
    tpu.vector_store %arg6[%c0_85, %c0_86, %c3_87], %179 {strides = array<i32>} : memref<1x1x8xf32, #tpu.memory_space<vmem>>, vector<1x1x1xf32>,
    %c0_88 = arith.constant 0 : index
    %c0_89 = arith.constant 0 : index
    %c4_90 = arith.constant 4 : index
    %180 = vector.load %arg6[%c0_88, %c0_89, %c4_90] : memref<1x1x8xf32, #tpu.memory_space<vmem>>, vector<1x1x1xf32>
    %181 = vector.shape_cast %180 : vector<1x1x1xf32> to vector<1x1xf32>
    %182 = arith.addf %181, %150 : vector<1x1xf32>
    %c0_91 = arith.constant 0 : index
    %c0_92 = arith.constant 0 : index
    %c4_93 = arith.constant 4 : index
    %183 = vector.load %arg6[%c0_91, %c0_92, %c4_93] : memref<1x1x8xf32, #tpu.memory_space<vmem>>, vector<1x1x1xf32>
    %184 = vector.shape_cast %183 : vector<1x1x1xf32> to vector<1x1xf32>
    %185 = vector.shape_cast %182 : vector<1x1xf32> to vector<1x1x1xf32>
    tpu.vector_store %arg6[%c0_91, %c0_92, %c4_93], %185 {strides = array<i32>} : memref<1x1x8xf32, #tpu.memory_space<vmem>>, vector<1x1x1xf32>,
    %c0_94 = arith.constant 0 : index
    %c0_95 = arith.constant 0 : index
    %c5 = arith.constant 5 : index
    %186 = vector.load %arg6[%c0_94, %c0_95, %c5] : memref<1x1x8xf32, #tpu.memory_space<vmem>>, vector<1x1x1xf32>
    %187 = vector.shape_cast %186 : vector<1x1x1xf32> to vector<1x1xf32>
    %188 = arith.addf %187, %155 : vector<1x1xf32>
    %c0_96 = arith.constant 0 : index
    %c0_97 = arith.constant 0 : index
    %c5_98 = arith.constant 5 : index
    %189 = vector.load %arg6[%c0_96, %c0_97, %c5_98] : memref<1x1x8xf32, #tpu.memory_space<vmem>>, vector<1x1x1xf32>
    %190 = vector.shape_cast %189 : vector<1x1x1xf32> to vector<1x1xf32>
    %191 = vector.shape_cast %188 : vector<1x1xf32> to vector<1x1x1xf32>
    tpu.vector_store %arg6[%c0_96, %c0_97, %c5_98], %191 {strides = array<i32>} : memref<1x1x8xf32, #tpu.memory_space<vmem>>, vector<1x1x1xf32>,
    return
  }
  func.func @transform_0(%arg0: i32, %arg1: i32) -> (i32, i32, i32) {
    %c0_i32 = arith.constant 0 : i32
    %c0_i32_0 = arith.constant 0 : i32
    return %arg0, %c0_i32, %arg1 : i32, i32, i32
  }
  func.func @transform_1(%arg0: i32, %arg1: i32) -> (i32, i32, i32) {
    %c0_i32 = arith.constant 0 : i32
    %c0_i32_0 = arith.constant 0 : i32
    return %arg0, %c0_i32, %arg1 : i32, i32, i32
  }
  func.func @transform_2(%arg0: i32, %arg1: i32) -> (i32, i32, i32) {
    %c0_i32 = arith.constant 0 : i32
    %c0_i32_0 = arith.constant 0 : i32
    return %arg0, %c0_i32, %arg1 : i32, i32, i32
  }
  func.func @transform_3(%arg0: i32, %arg1: i32) -> (i32, i32, i32) {
    %c0_i32 = arith.constant 0 : i32
    %c0_i32_0 = arith.constant 0 : i32
    %c0_i32_1 = arith.constant 0 : i32
    return %arg0, %c0_i32, %c0_i32_0 : i32, i32, i32
  }
  func.func @transform_4(%arg0: i32, %arg1: i32) -> (i32, i32, i32) {
    %c0_i32 = arith.constant 0 : i32
    %c0_i32_0 = arith.constant 0 : i32
    %c0_i32_1 = arith.constant 0 : i32
    return %arg0, %c0_i32, %c0_i32_0 : i32, i32, i32
  }
}

</mosaic_0001>

<llo_original>
// kernel: tpu_custom_call.1
$region0: #{tpu_custom_call.1}
  #allocation0 [shape = 'u32[]', space=smem, size = 0x4, offset = 0x4, fixed_abs, tag = 'smem constant byte address 0x4 - core index']
  #allocation1 [shape = 'u32[144,128]{1,0:T(1,128)}', space=vmem, size = 0x12000, scoped, tag = 'internal scratch']
  %s0 = inlined_call_operand.hbm [shape: f32[2,4,256], index: 0, kind: input, shape index: {}]
  %s1 = inlined_call_operand.hbm [shape: f32[2,4,256], index: 1, kind: input, shape index: {}]
  %s2 = inlined_call_operand.hbm [shape: s32[2,1,256], index: 2, kind: input, shape index: {}]
  %s3 = inlined_call_operand.hbm [shape: f32[2,4,8], index: 3, kind: output, shape index: {0}]
  %s4 = inlined_call_operand.hbm [shape: f32[2,1,8], index: 4, kind: output, shape index: {1}]
  %5 = xla_tuple %s3, %s4
  %s6 = sld [smem:[#allocation0]]
  $region69: #{tpu_custom_call.1} parent=0
    _
  %s8 = ssub.s32 1, %s6
  %s9 = scalar_select 0, %s8, %s6
  $region1: #{tpu_custom_call.1} parent=0
    #allocation2 [shape = 'u8[8192]{0}', space=vmem, size = 0x2000, scoped, tag = 'input window, operand 0']
    #allocation3 [shape = 's32[2]{0}', space=sflag, size = 0x8, scoped, tag = 'scoped memory for tpu_custom_call.1']
    #allocation4 [shape = 's32[2]{0}', space=sflag, size = 0x8, scoped, tag = 'scoped memory for tpu_custom_call.1']
    #allocation5 [shape = 'u8[8192]{0}', space=vmem, size = 0x2000, scoped, tag = 'input window, operand 1']
    #allocation6 [shape = 's32[2]{0}', space=sflag, size = 0x8, scoped, tag = 'scoped memory for tpu_custom_call.1']
    #allocation7 [shape = 'u8[2048]{0}', space=vmem, size = 0x800, scoped, tag = 'input window, operand 2']
    #allocation8 [shape = 'u8[4096]{0}', space=vmem, size = 0x1000, scoped, tag = 'output window, operand 0']
    #allocation9 [shape = 'u8[1024]{0}', space=vmem, size = 0x400, scoped, tag = 'output window, operand 1']
    #allocation10 [shape = 's32[2]{0}', space=sflag, size = 0x8, scoped, tag = 'scoped memory for tpu_custom_call.1']
    %10 = vsyncpa [#allocation3], 0
    %s11 = scalar_lea.sflag [#allocation3], 1
    %12 = vsyncpa %s11, 0
    %13 = vsyncpa [#allocation6], 0
    %s14 = scalar_lea.sflag [#allocation6], 1
    %15 = vsyncpa %s14, 0
    %16 = vsyncpa [#allocation4], 0
    %s17 = scalar_lea.sflag [#allocation4], 1
    %18 = vsyncpa %s17, 0
    %19 = vsyncpa [#allocation10], 0
    %s20 = scalar_lea.sflag [#allocation10], 1
    %21 = vsyncpa %s20, 0
    loop: start=0, step=1, limit=4
    $region2: #{tpu_custom_call.1} parent=1 // loop_pre_header
      _
    $region3: #{tpu_custom_call.1} parent=1 // loop_header
      %s23 = sphi 0, %s27
      %p24 = scmp.ge.s32.totalorder %s23, 4
      %s30 = sphi 0, %s42
      %s31 = sphi 0, %s38
      %s32 = sphi 0, %s30
      %s33 = sphi 0, %s31
      %s34 = sphi 0, %s32
      %s35 = sphi 0, %s33
      %s47 = sphi 0, %s49
      %s50 = sphi 0, %s47
      %s51 = sphi 0, %s50
      %s67 = sphi 0, %s51
      %s75 = sphi 0, %s77
      %s78 = sphi 0, %s75
      %s79 = sphi 0, %s78
      %s95 = sphi 0, %s79
      %s103 = sphi 0, %s105
      %s106 = sphi 0, %s103
      %s107 = sphi 0, %s106
      %s123 = sphi 0, %s107
      %s129 = sphi 0, %s131
      %s132 = sphi 0, %s129
      %s133 = sphi 0, %s132
      %s149 = sphi 0, %s133
      %s155 = sphi 0, %s157
      %s158 = sphi 0, %s155
      %s159 = sphi 0, %s158
      %s175 = sphi 0, %s159
    $region4: #{tpu_custom_call.1} parent=1 // loop_header_branch
      %26 = sbr.rel (%p24) target = $region8
    $region5: #{tpu_custom_call.1} parent=1 // loop_body
      %s28 = ssub.s32 %s23, 1
      %s29 = ssub.s32 %s23, 2
      %s36 = sadd.s32 1, %s31
      %p37 = scmp.ge.s32.totalorder %s36, 1
      %s38 = scalar_select %p37, 0, %s36
      %s39 = sadd.s32 1, %s30
      %s40 = scalar_select %p37, %s39, %s30
      %p41 = scmp.ge.s32.totalorder %s40, 2
      %s42 = scalar_select %p41, 0, %s40
      %s43 = ssub.s32 %s30, %s42
      %s44 = ssub.s32 %s31, %s38
      %s45 = sor.u32 %s43, %s44
      %p46 = scmp.eq.s32.totalorder %s45, 0
      %s48 = sadd.s32 %s47, 1
      %s49 = scalar_select %p46, %s47, %s48
      %p52 = pneg %p46
      %p53 = scmp.eq.s32.totalorder %s23, 1
      %p54 = por %p52, %p53
      %p55 = scmp.ne.s32.totalorder %s47, %s50
      %p56 = scmp.eq.s32.totalorder %s23, 0
      %p57 = por %p55, %p56
      %p58 = scmp.ne.s32.totalorder %s47, %s50
      %p59 = scmp.eq.s32.totalorder %s28, 1
      %p60 = por %p58, %p59
      %p61 = scmp.ne.s32.totalorder %s50, %s51
      %p62 = scmp.eq.s32.totalorder %s28, 0
      %p63 = por %p61, %p62
      %p64 = scmp.ne.s32.totalorder %s50, %s51
      %p65 = scmp.eq.s32.totalorder %s29, 1
      %p66 = por %p64, %p65
      %p68 = scmp.ne.s32.totalorder %s51, %s67
      %p69 = scmp.eq.s32.totalorder %s29, 0
      %p70 = por %p68, %p69
      %s71 = ssub.s32 %s30, %s42
      %s72 = ssub.s32 %s31, %s38
      %s73 = sor.u32 %s71, %s72
      %p74 = scmp.eq.s32.totalorder %s73, 0
      %s76 = sadd.s32 %s75, 1
      %s77 = scalar_select %p74, %s75, %s76
      %p80 = pneg %p74
      %p81 = scmp.eq.s32.totalorder %s23, 1
      %p82 = por %p80, %p81
      %p83 = scmp.ne.s32.totalorder %s75, %s78
      %p84 = scmp.eq.s32.totalorder %s23, 0
      %p85 = por %p83, %p84
      %p86 = scmp.ne.s32.totalorder %s75, %s78
      %p87 = scmp.eq.s32.totalorder %s28, 1
      %p88 = por %p86, %p87
      %p89 = scmp.ne.s32.totalorder %s78, %s79
      %p90 = scmp.eq.s32.totalorder %s28, 0
      %p91 = por %p89, %p90
      %p92 = scmp.ne.s32.totalorder %s78, %s79
      %p93 = scmp.eq.s32.totalorder %s29, 1
      %p94 = por %p92, %p93
      %p96 = scmp.ne.s32.totalorder %s79, %s95
      %p97 = scmp.eq.s32.totalorder %s29, 0
      %p98 = por %p96, %p97
      %s99 = ssub.s32 %s30, %s42
      %s100 = ssub.s32 %s31, %s38
      %s101 = sor.u32 %s99, %s100
      %p102 = scmp.eq.s32.totalorder %s101, 0
      %s104 = sadd.s32 %s103, 1
      %s105 = scalar_select %p102, %s103, %s104
      %p108 = pneg %p102
      %p109 = scmp.eq.s32.totalorder %s23, 1
      %p110 = por %p108, %p109
      %p111 = scmp.ne.s32.totalorder %s103, %s106
      %p112 = scmp.eq.s32.totalorder %s23, 0
      %p113 = por %p111, %p112
      %p114 = scmp.ne.s32.totalorder %s103, %s106
      %p115 = scmp.eq.s32.totalorder %s28, 1
      %p116 = por %p114, %p115
      %p117 = scmp.ne.s32.totalorder %s106, %s107
      %p118 = scmp.eq.s32.totalorder %s28, 0
      %p119 = por %p117, %p118
      %p120 = scmp.ne.s32.totalorder %s106, %s107
      %p121 = scmp.eq.s32.totalorder %s29, 1
      %p122 = por %p120, %p121
      %p124 = scmp.ne.s32.totalorder %s107, %s123
      %p125 = scmp.eq.s32.totalorder %s29, 0
      %p126 = por %p124, %p125
      %s127 = ssub.s32 %s30, %s42
      %p128 = scmp.eq.s32.totalorder %s127, 0
      %s130 = sadd.s32 %s129, 1
      %s131 = scalar_select %p128, %s129, %s130
      %p134 = pneg %p128
      %p135 = scmp.eq.s32.totalorder %s23, 1
      %p136 = por %p134, %p135
      %p137 = scmp.ne.s32.totalorder %s129, %s132
      %p138 = scmp.eq.s32.totalorder %s23, 0
      %p139 = por %p137, %p138
      %p140 = scmp.ne.s32.totalorder %s129, %s132
      %p141 = scmp.eq.s32.totalorder %s28, 1
      %p142 = por %p140, %p141
      %p143 = scmp.ne.s32.totalorder %s132, %s133
      %p144 = scmp.eq.s32.totalorder %s28, 0
      %p145 = por %p143, %p144
      %p146 = scmp.ne.s32.totalorder %s132, %s133
      %p147 = scmp.eq.s32.totalorder %s29, 1
      %p148 = por %p146, %p147
      %p150 = scmp.ne.s32.totalorder %s133, %s149
      %p151 = scmp.eq.s32.totalorder %s29, 0
      %p152 = por %p150, %p151
      %s153 = ssub.s32 %s30, %s42
      %p154 = scmp.eq.s32.totalorder %s153, 0
      %s156 = sadd.s32 %s155, 1
      %s157 = scalar_select %p154, %s155, %s156
      %p160 = pneg %p154
      %p161 = scmp.eq.s32.totalorder %s23, 1
      %p162 = por %p160, %p161
      %p163 = scmp.ne.s32.totalorder %s155, %s158
      %p164 = scmp.eq.s32.totalorder %s23, 0
      %p165 = por %p163, %p164
      %p166 = scmp.ne.s32.totalorder %s155, %s158
      %p167 = scmp.eq.s32.totalorder %s28, 1
      %p168 = por %p166, %p167
      %p169 = scmp.ne.s32.totalorder %s158, %s159
      %p170 = scmp.eq.s32.totalorder %s28, 0
      %p171 = por %p169, %p170
      %p172 = scmp.ne.s32.totalorder %s158, %s159
      %p173 = scmp.eq.s32.totalorder %s29, 1
      %p174 = por %p172, %p173
      %p176 = scmp.ne.s32.totalorder %s159, %s175
      %p177 = scmp.eq.s32.totalorder %s29, 0
      %p178 = por %p176, %p177
      %p179 = scmp.le.s32.totalorder 1, %s23
      %p180 = scmp.lt.s32.totalorder %s23, 3
      %p181 = pnand %p179, %p180
      %p182 = pneg %p181
      // Predicated region
      $region9: #{tpu_custom_call.1} parent=5 // pred_check
        _
      $region10: #{tpu_custom_call.1} parent=5 // pred_check_branch
        %184 = sbr.rel (%p181) target = $region12
      $region11: #{tpu_custom_call.1} parent=5 // pred_region
        %s185 = ssub.s32 %s23, 1
      $region12: #{tpu_custom_call.1} parent=5 // pred_fallthru
        _
      %p186 = scmp.lt.s32.totalorder %s23, 2
      // Predicated region
      $region13: #{tpu_custom_call.1} parent=5 // pred_check
        %p187 = pneg %p186
      $region14: #{tpu_custom_call.1} parent=5 // pred_check_branch
        %189 = sbr.rel (%p187) target = $region16
      $region15: #{tpu_custom_call.1} parent=5 // pred_region
        // Predicated region
        $region17: #{tpu_custom_call.1} parent=15 // pred_check
          %p190 = pneg %p57
        $region18: #{tpu_custom_call.1} parent=15 // pred_check_branch
          %192 = sbr.rel (%p190) target = $region20
        $region19: #{tpu_custom_call.1} parent=15 // pred_region
          %s193 = sand.u32 %s47, 1
          %s194 = scalar_lea.sflag [#allocation3], %s193
          %s195 = sand.u32 %s47, 1
          %s196 = smul.addr %s195, 8
          %s197 = scalar_lea.vmem [#allocation2], %s196
          %s198 = smul.u32 2, %s31
          %s200 = ssub.s32 128, 128
          %201 = vsyncadd %s194, %s200
          %s202 = smul.addr %s30, 2
          %s203 = sadd.s32 %s198, %s202
          %s204 = smul.addr %s203, 64
          %s205 = scalar_lea.hbm %s0, %s204
          %s207 = sshll.u32 %s197, 4
          %s208 = int_to_ptr.vmem [resolvable:$true] %s207
          %210 = dma.hbm_to_vmem [thread:$0]  %s205, 128, %s208, %s194
        $region20: #{tpu_custom_call.1} parent=15 // pred_fallthru
          _
        // Predicated region
        $region21: #{tpu_custom_call.1} parent=15 // pred_check
          %p211 = pneg %p85
        $region22: #{tpu_custom_call.1} parent=15 // pred_check_branch
          %213 = sbr.rel (%p211) target = $region24
        $region23: #{tpu_custom_call.1} parent=15 // pred_region
          %s214 = sand.u32 %s23, 1
          %s215 = scalar_lea.sflag [#allocation6], %s214
          %s216 = sand.u32 %s75, 1
          %s217 = smul.addr %s216, 8
          %s218 = scalar_lea.vmem [#allocation5], %s217
          %s219 = smul.u32 2, %s31
          %s221 = ssub.s32 128, 128
          %222 = vsyncadd %s215, %s221
          %s223 = smul.addr %s30, 2
          %s224 = sadd.s32 %s219, %s223
          %s225 = smul.addr %s224, 64
          %s226 = scalar_lea.hbm %s1, %s225
          %s228 = sshll.u32 %s218, 4
          %s229 = int_to_ptr.vmem [resolvable:$true] %s228
          %231 = dma.hbm_to_vmem [thread:$0]  %s226, 128, %s229, %s215
        $region24: #{tpu_custom_call.1} parent=15 // pred_fallthru
          _
        // Predicated region
        $region25: #{tpu_custom_call.1} parent=15 // pred_check
          %p232 = pneg %p113
        $region26: #{tpu_custom_call.1} parent=15 // pred_check_branch
          %234 = sbr.rel (%p232) target = $region28
        $region27: #{tpu_custom_call.1} parent=15 // pred_region
          %s235 = sand.u32 %s23, 1
          %s236 = scalar_lea.sflag [#allocation6], %s235
          %s237 = sand.u32 %s103, 1
          %s238 = smul.addr %s237, 2
          %s239 = scalar_lea.vmem [#allocation7], %s238
          %s240 = smul.u32 2, %s31
          %s242 = ssub.s32 32, 32
          %243 = vsyncadd %s236, %s242
          %s244 = smul.addr %s30, 2
          %s245 = sadd.s32 %s240, %s244
          %s246 = smul.addr %s245, 16
          %s247 = scalar_lea.hbm %s2, %s246
          %s249 = sshll.u32 %s239, 4
          %s250 = int_to_ptr.vmem [resolvable:$true] %s249
          %252 = dma.hbm_to_vmem [thread:$0]  %s247, 32, %s250, %s236
        $region28: #{tpu_custom_call.1} parent=15 // pred_fallthru
          _
      $region16: #{tpu_custom_call.1} parent=5 // pred_fallthru
        _
      %p253 = scmp.le.s32.totalorder 1, %s23
      %p254 = scmp.lt.s32.totalorder %s23, 3
      %p255 = pnand %p253, %p254
      %p256 = pneg %p255
      // Predicated region
      $region29: #{tpu_custom_call.1} parent=5 // pred_check
        _
      $region30: #{tpu_custom_call.1} parent=5 // pred_check_branch
        %258 = sbr.rel (%p255) target = $region32
      $region31: #{tpu_custom_call.1} parent=5 // pred_region
        %s259 = ssub.s32 %s23, 1
        %s260 = sand.u32 %s50, 1
        %s261 = scalar_lea.sflag [#allocation3], %s260
        %s262 = sand.u32 %s50, 1
        %s263 = smul.addr %s262, 8
        %s264 = scalar_lea.vmem [#allocation2], %s263
        // Predicated region
        $region33: #{tpu_custom_call.1} parent=31 // pred_check
          %p265 = pneg %p63
        $region34: #{tpu_custom_call.1} parent=31 // pred_check_branch
          %267 = sbr.rel (%p265) target = $region36
        $region35: #{tpu_custom_call.1} parent=31 // pred_region
          %268 = dma.done %s261, 128
        $region36: #{tpu_custom_call.1} parent=31 // pred_fallthru
          _
        %s269 = sand.u32 %s28, 1
        %s270 = scalar_lea.sflag [#allocation6], %s269
        %s271 = sand.u32 %s78, 1
        %s272 = smul.addr %s271, 8
        %s273 = scalar_lea.vmem [#allocation5], %s272
        // Predicated region
        $region37: #{tpu_custom_call.1} parent=31 // pred_check
          %p274 = pneg %p91
        $region38: #{tpu_custom_call.1} parent=31 // pred_check_branch
          %276 = sbr.rel (%p274) target = $region40
        $region39: #{tpu_custom_call.1} parent=31 // pred_region
          %277 = dma.done %s270, 128
        $region40: #{tpu_custom_call.1} parent=31 // pred_fallthru
          _
        %s278 = sand.u32 %s28, 1
        %s279 = scalar_lea.sflag [#allocation6], %s278
        %s280 = sand.u32 %s106, 1
        %s281 = smul.addr %s280, 2
        %s282 = scalar_lea.vmem [#allocation7], %s281
        // Predicated region
        $region41: #{tpu_custom_call.1} parent=31 // pred_check
          %p283 = pneg %p119
        $region42: #{tpu_custom_call.1} parent=31 // pred_check_branch
          %285 = sbr.rel (%p283) target = $region44
        $region43: #{tpu_custom_call.1} parent=31 // pred_region
          %286 = dma.done %s279, 32
        $region44: #{tpu_custom_call.1} parent=31 // pred_fallthru
          _
        %s287 = sand.u32 %s50, 1
        %s288 = scalar_lea.sflag [#allocation3], %s287
        %s289 = sand.u32 %s50, 1
        %s290 = smul.addr %s289, 8
        %s291 = scalar_lea.vmem [#allocation2], %s290
        %p292 = pneg %p63
        %p293 = pneg %p60
        %s294 = sand.u32 %s28, 1
        %s295 = scalar_lea.sflag [#allocation6], %s294
        %s296 = sand.u32 %s78, 1
        %s297 = smul.addr %s296, 8
        %s298 = scalar_lea.vmem [#allocation5], %s297
        %p299 = pneg %p91
        %p300 = pneg %p88
        %s301 = sand.u32 %s28, 1
        %s302 = scalar_lea.sflag [#allocation6], %s301
        %s303 = sand.u32 %s106, 1
        %s304 = smul.addr %s303, 2
        %s305 = scalar_lea.vmem [#allocation7], %s304
        %p306 = pneg %p119
        %p307 = pneg %p116
        %p308 = pneg %p145
        %p309 = pneg %p142
        %s310 = sand.u32 %s132, 1
        %s311 = scalar_lea.sflag [#allocation4], %s310
        %s312 = sand.u32 %s132, 1
        %s313 = smul.addr %s312, 4
        %s314 = scalar_lea.vmem [#allocation8], %s313
        %p315 = pneg %p171
        %p316 = pneg %p168
        %s317 = sand.u32 %s158, 1
        %s318 = scalar_lea.sflag [#allocation10], %s317
        %s319 = sand.u32 %s158, 1
        %s320 = scalar_lea.vmem [#allocation9], %s319
        %s321 = smul.u32 2, %s33
        %s322 = smul.u32 2, %s33
        %s323 = smul.u32 2, %s33
        %p324 = scmp.eq.s32.totalorder %s33, 0
        // Predicated region
        $region45: #{tpu_custom_call.1} parent=31 // pred_check
          %p325 = pneg %p324
        $region46: #{tpu_custom_call.1} parent=31 // pred_check_branch
          %327 = sbr.rel (%p325) target = $region48
        $region47: #{tpu_custom_call.1} parent=31 // pred_region
          %vm328 = vcmask 60416
          %329 = vst.msk [vmem:[%s314] sm:$0xf] %vm328, 0.0
          %vm330 = vcmask 57344
          %331 = vst.msk [vmem:[%s320] sm:$0x1] %vm330, 0.0
        $region48: #{tpu_custom_call.1} parent=31 // pred_fallthru
          _
        %v332 = vld [vmem:[%s264] sm:$0xff]
        %v333 = vld [vmem:[%s273] sm:$0xff]
        %v334 = vld [vmem:[%s282] sm:$0x3]
        %v336 = vcombine.high %v332, %v332
        %vm338 = vcmask 1043456
        %v339 = vsel %vm338, %v332, -inf
        %v340 = vrot.slane %v339, 4
        %v341 = vmax.f32 %v339, %v340
        %v342 = vrot.slane %v341, 2
        %v343 = vmax.f32 %v341, %v342
        %v344 = vrot.slane %v343, 1
        %v345 = vmax.f32 %v343, %v344
        %v346 = vsel %vm338, %v336, -inf
        %v347 = vrot.slane %v346, 4
        %v348 = vmax.f32 %v346, %v347
        %v349 = vrot.slane %v348, 2
        %v350 = vmax.f32 %v348, %v349
        %v351 = vrot.slane %v350, 1
        %v352 = vmax.f32 %v350, %v351
        %v355 = vcombine.low %v345, %v352
        %v357 = vsub.f32 %v332, %v355
        %v358 = vmul.f32 %v357, 1.442695
        %v359 = vpow.pop %v358
        %v361 = vcombine.high %v359, %v359
        %v363 = vsel %vm338, %v359, 0.0
        %v364 = vrot.slane %v363, 4
        %v365 = vadd.f32 %v363, %v364
        %v366 = vrot.slane %v365, 2
        %v367 = vadd.f32 %v365, %v366
        %v368 = vrot.slane %v367, 1
        %v369 = vadd.f32 %v367, %v368
        %v370 = vsel %vm338, %v361, 0.0
        %v371 = vrot.slane %v370, 4
        %v372 = vadd.f32 %v370, %v371
        %v373 = vrot.slane %v372, 2
        %v374 = vadd.f32 %v372, %v373
        %v375 = vrot.slane %v374, 1
        %v376 = vadd.f32 %v374, %v375
        %v377 = vrcp.pop %v369
        %v378 = vmul.f32 1.0, %v377
        %v379 = vrcp.pop %v376
        %v380 = vmul.f32 1.0, %v379
        %v383 = vcombine.low %v378, %v380
        %v385 = vmul.f32 %v359, %v383
        %v386 = vlog2.pop %v369
        %v387 = vmul.f32 %v386, 0.6931472
        %v388 = vlog2.pop %v376
        %v389 = vmul.f32 %v388, 0.6931472
        %v392 = vcombine.low %v387, %v389
        %v394 = vsub.f32 %v357, %v392
        %v396 = vcombine.high %v333, %v333
        %v398 = vsel %vm338, %v333, -inf
        %v399 = vrot.slane %v398, 4
        %v400 = vmax.f32 %v398, %v399
        %v401 = vrot.slane %v400, 2
        %v402 = vmax.f32 %v400, %v401
        %v403 = vrot.slane %v402, 1
        %v404 = vmax.f32 %v402, %v403
        %v405 = vsel %vm338, %v396, -inf
        %v406 = vrot.slane %v405, 4
        %v407 = vmax.f32 %v405, %v406
        %v408 = vrot.slane %v407, 2
        %v409 = vmax.f32 %v407, %v408
        %v410 = vrot.slane %v409, 1
        %v411 = vmax.f32 %v409, %v410
        %v414 = vcombine.low %v404, %v411
        %v416 = vsub.f32 %v333, %v414
        %v417 = vmul.f32 %v416, 1.442695
        %v418 = vpow.pop %v417
        %v420 = vcombine.high %v418, %v418
        %v422 = vsel %vm338, %v418, 0.0
        %v423 = vrot.slane %v422, 4
        %v424 = vadd.f32 %v422, %v423
        %v425 = vrot.slane %v424, 2
        %v426 = vadd.f32 %v424, %v425
        %v427 = vrot.slane %v426, 1
        %v428 = vadd.f32 %v426, %v427
        %v429 = vsel %vm338, %v420, 0.0
        %v430 = vrot.slane %v429, 4
        %v431 = vadd.f32 %v429, %v430
        %v432 = vrot.slane %v431, 2
        %v433 = vadd.f32 %v431, %v432
        %v434 = vrot.slane %v433, 1
        %v435 = vadd.f32 %v433, %v434
        %v436 = vrcp.pop %v428
        %v437 = vmul.f32 1.0, %v436
        %v438 = vrcp.pop %v435
        %v439 = vmul.f32 1.0, %v438
        %v442 = vcombine.low %v437, %v439
        %v444 = vmul.f32 %v418, %v442
        %v445 = vlog2.pop %v428
        %v446 = vmul.f32 %v445, 0.6931472
        %v447 = vlog2.pop %v435
        %v448 = vmul.f32 %v447, 0.6931472
        %v451 = vcombine.low %v446, %v448
        %v453 = vsub.f32 %v416, %v451
        %v454 = vlaneseq
        %v455 = vshrl.u32 %v454, 7
        %v456 = vlaneseq
        %v457 = vshrl.u32 %v456, 7
        %v458 = vsub.s32 0, %v457
        %v459 = vrot.slane %v334, %v458
        %v460 = vlaneseq
        %v461 = vshrl.u32 %v460, 7
        %v462 = vsub.s32 1, %v461
        %v463 = vrot.slane %v334, %v462
        %vm464 = vcmp.eq.s32.totalorder %v455, %v459
        %vm465 = vcmp.eq.s32.totalorder %v455, %v463
        %v466 = vsel %vm464, 1, 0
        %v467 = vsel %vm465, 1, 0
        %v468 = vcvt.s32.f32 %v466
        %v469 = vcvt.s32.f32 %v467
        %v470 = vld [vmem:[%s314] sm:$0xf]
        %v473 = vcombine.low %v468, %v469
        %v475 = vmul.f32 %v385, %v473
        %v477 = vcombine.high %v475, %v475
        %v479 = vsel %vm338, %v475, 0.0
        %v480 = vsel %vm338, %v477, 0.0
        %v481 = vadd.f32 %v479, %v480
        %482 = vadd.xlane.f32.xlu0 %v481
        %v483 = vpop.xlane.xlu0 %482
        %v484 = vadd.f32 %v470, %v483
        %vm485 = vcmask 3072
        %486 = vst.msk [vmem:[%s314] sm:$0xf] %vm485, %v484
        %v487 = vld [vmem:[%s314] sm:$0xf]
        %v489 = vcombine.high %v385, %v385
        %v491 = vsel %vm338, %v385, 0.0
        %v492 = vsel %vm338, %v489, 0.0
        %v493 = vadd.f32 %v491, %v492
        %494 = vadd.xlane.f32.xlu0 %v493
        %v495 = vpop.xlane.xlu0 %494
        %v496 = vadd.f32 %v487, %v495
        %vm497 = vcmask 11272
        %498 = vst.msk [vmem:[%s314] sm:$0xf] %vm497, %v496
        %v499 = vld [vmem:[%s314] sm:$0xf]
        %v500 = vmul.f32 %v444, %v473
        %v502 = vcombine.high %v500, %v500
        %v504 = vsel %vm338, %v500, 0.0
        %v505 = vsel %vm338, %v502, 0.0
        %v506 = vadd.f32 %v504, %v505
        %507 = vadd.xlane.f32.xlu0 %v506
        %v508 = vpop.xlane.xlu0 %507
        %v509 = vadd.f32 %v499, %v508
        %vm510 = vcmask 19472
        %511 = vst.msk [vmem:[%s314] sm:$0xf] %vm510, %v509
        %v512 = vld [vmem:[%s314] sm:$0xf]
        %v514 = vcombine.high %v444, %v444
        %v516 = vsel %vm338, %v444, 0.0
        %v517 = vsel %vm338, %v514, 0.0
        %v518 = vadd.f32 %v516, %v517
        %519 = vadd.xlane.f32.xlu0 %v518
        %v520 = vpop.xlane.xlu0 %519
        %v521 = vadd.f32 %v512, %v520
        %vm522 = vcmask 27672
        %523 = vst.msk [vmem:[%s314] sm:$0xf] %vm522, %v521
        %v524 = vld [vmem:[%s314] sm:$0xf]
        %v525 = vsel %vm338, %v468, 0.0
        %v526 = vsel %vm338, %v469, 0.0
        %v527 = vadd.f32 %v525, %v526
        %528 = vadd.xlane.f32.xlu0 %v527
        %v529 = vpop.xlane.xlu0 %528
        %v530 = vadd.f32 %v524, %v529
        %vm531 = vcmask 35872
        %532 = vst.msk [vmem:[%s314] sm:$0xf] %vm531, %v530
        %v533 = vmul.f32 %v385, 0.84442186
        %v534 = vmul.f32 %v444, 0.15557815
        %v535 = vadd.f32 %v533, %v534
        %v536 = vmul.f32 %v535, 1.442695
        %v537 = vpow.pop %v536
        %v539 = vcombine.high %v537, %v537
        %v541 = vsel %vm338, %v537, 0.0
        %v542 = vrot.slane %v541, 4
        %v543 = vadd.f32 %v541, %v542
        %v544 = vrot.slane %v543, 2
        %v545 = vadd.f32 %v543, %v544
        %v546 = vrot.slane %v545, 1
        %v547 = vadd.f32 %v545, %v546
        %v548 = vsel %vm338, %v539, 0.0
        %v549 = vrot.slane %v548, 4
        %v550 = vadd.f32 %v548, %v549
        %v551 = vrot.slane %v550, 2
        %v552 = vadd.f32 %v550, %v551
        %v553 = vrot.slane %v552, 1
        %v554 = vadd.f32 %v552, %v553
        %v555 = vrcp.pop %v547
        %v556 = vrcp.pop %v554
        %v559 = vcombine.low %v555, %v556
        %v561 = vmul.f32 %v537, %v559
        %v562 = vcvt.f32.s32.to.zero.pseudo %v561
        %v563 = vlaneseq
        %v564 = vshrl.u32 %v563, 7
        %v565 = vsub.s32 0, %v564
        %v566 = vrot.slane %v562, %v565
        %v567 = vlaneseq
        %v568 = vshrl.u32 %v567, 7
        %v569 = vsub.s32 4, %v568
        %v570 = vrot.slane %v562, %v569
        %v571 = vlaneseq
        %v572 = vshrl.u32 %v571, 7
        %v573 = vsub.s32 0, %v572
        %v574 = vrot.slane %v566, %v573
        %v575 = vlaneseq
        %v576 = vshrl.u32 %v575, 7
        %v577 = vsub.s32 0, %v576
        %v578 = vrot.slane %v570, %v577
        %vm579 = vcmp.eq.s32.totalorder %v455, %v574
        %vm580 = vcmp.eq.s32.totalorder %v455, %v578
        %v582 = vcombine.high %v394, %v394
        %v584 = vsel %vm579, %v394, 0.0
        %v585 = vsel %vm580, %v582, 0.0
        %v586 = vsel %vm338, %v584, 0.0
        %v587 = vrot.slane %v586, 4
        %v588 = vadd.f32 %v586, %v587
        %v589 = vrot.slane %v588, 2
        %v590 = vadd.f32 %v588, %v589
        %v591 = vrot.slane %v590, 1
        %v592 = vadd.f32 %v590, %v591
        %v593 = vsel %vm338, %v585, 0.0
        %v594 = vrot.slane %v593, 4
        %v595 = vadd.f32 %v593, %v594
        %v596 = vrot.slane %v595, 2
        %v597 = vadd.f32 %v595, %v596
        %v598 = vrot.slane %v597, 1
        %v599 = vadd.f32 %v597, %v598
        %v600 = vsub.f32 0.0, %v592
        %v601 = vsub.f32 0.0, %v599
        %v602 = vsub.f32 %v453, %v394
        %v603 = vmul.f32 %v444, %v602
        %v605 = vcombine.high %v603, %v603
        %v607 = vsel %vm338, %v603, 0.0
        %v608 = vrot.slane %v607, 4
        %v609 = vadd.f32 %v607, %v608
        %v610 = vrot.slane %v609, 2
        %v611 = vadd.f32 %v609, %v610
        %v612 = vrot.slane %v611, 1
        %v613 = vadd.f32 %v611, %v612
        %v614 = vsel %vm338, %v605, 0.0
        %v615 = vrot.slane %v614, 4
        %v616 = vadd.f32 %v614, %v615
        %v617 = vrot.slane %v616, 2
        %v618 = vadd.f32 %v616, %v617
        %v619 = vrot.slane %v618, 1
        %v620 = vadd.f32 %v618, %v619
        %v621 = vsub.f32 0.0, %v613
        %v622 = vsub.f32 0.0, %v620
        %v623 = vmul.f32 %v621, 1.442695
        %v624 = vpow.pop %v623
        %v625 = vmul.f32 %v622, 1.442695
        %v626 = vpow.pop %v625
        %v627 = vmul.f32 %v600, %v624
        %v628 = vmul.f32 %v601, %v626
        %vm629 = vcmask 1040384
        %v630 = vsel %vm629, %v627, 0.0
        %v631 = vsel %vm629, %v628, 0.0
        %v632 = vadd.f32 %v630, %v631
        %633 = vadd.xlane.f32.xlu0 %v632
        %v634 = vpop.xlane.xlu0 %633
        %v635 = vrot.slane %v634, 4
        %v636 = vadd.f32 %v634, %v635
        %v637 = vrot.slane %v636, 2
        %v638 = vadd.f32 %v636, %v637
        %v639 = vrot.slane %v638, 1
        %v640 = vadd.f32 %v638, %v639
        %s641 = vtos %v640
        %v642 = vstv %s641
        %v643 = vsel %vm629, %v624, 0.0
        %v644 = vsel %vm629, %v626, 0.0
        %v645 = vadd.f32 %v643, %v644
        %646 = vadd.xlane.f32.xlu0 %v645
        %v647 = vpop.xlane.xlu0 %646
        %v648 = vrot.slane %v647, 4
        %v649 = vadd.f32 %v647, %v648
        %v650 = vrot.slane %v649, 2
        %v651 = vadd.f32 %v649, %v650
        %v652 = vrot.slane %v651, 1
        %v653 = vadd.f32 %v651, %v652
        %s654 = vtos %v653
        %v655 = vstv %s654
        %v656 = vsel %vm629, %v613, 0.0
        %v657 = vsel %vm629, %v620, 0.0
        %v658 = vadd.f32 %v656, %v657
        %659 = vadd.xlane.f32.xlu0 %v658
        %v660 = vpop.xlane.xlu0 %659
        %v661 = vrot.slane %v660, 4
        %v662 = vadd.f32 %v660, %v661
        %v663 = vrot.slane %v662, 2
        %v664 = vadd.f32 %v662, %v663
        %v665 = vrot.slane %v664, 1
        %v666 = vadd.f32 %v664, %v665
        %s667 = vtos %v666
        %v668 = vstv %s667
        %v670 = vcombine.high %v453, %v453
        %v672 = vsel %vm579, %v453, 0.0
        %v673 = vsel %vm580, %v670, 0.0
        %v674 = vsel %vm338, %v672, 0.0
        %v675 = vrot.slane %v674, 4
        %v676 = vadd.f32 %v674, %v675
        %v677 = vrot.slane %v676, 2
        %v678 = vadd.f32 %v676, %v677
        %v679 = vrot.slane %v678, 1
        %v680 = vadd.f32 %v678, %v679
        %v681 = vsel %vm338, %v673, 0.0
        %v682 = vrot.slane %v681, 4
        %v683 = vadd.f32 %v681, %v682
        %v684 = vrot.slane %v683, 2
        %v685 = vadd.f32 %v683, %v684
        %v686 = vrot.slane %v685, 1
        %v687 = vadd.f32 %v685, %v686
        %v688 = vsub.f32 0.0, %v680
        %v689 = vsub.f32 0.0, %v687
        %v690 = vsub.f32 %v394, %v453
        %v691 = vmul.f32 %v385, %v690
        %v693 = vcombine.high %v691, %v691
        %v695 = vsel %vm338, %v691, 0.0
        %v696 = vrot.slane %v695, 4
        %v697 = vadd.f32 %v695, %v696
        %v698 = vrot.slane %v697, 2
        %v699 = vadd.f32 %v697, %v698
        %v700 = vrot.slane %v699, 1
        %v701 = vadd.f32 %v699, %v700
        %v702 = vsel %vm338, %v693, 0.0
        %v703 = vrot.slane %v702, 4
        %v704 = vadd.f32 %v702, %v703
        %v705 = vrot.slane %v704, 2
        %v706 = vadd.f32 %v704, %v705
        %v707 = vrot.slane %v706, 1
        %v708 = vadd.f32 %v706, %v707
        %v709 = vsub.f32 0.0, %v701
        %v710 = vsub.f32 0.0, %v708
        %v711 = vmul.f32 %v709, 1.442695
        %v712 = vpow.pop %v711
        %v713 = vmul.f32 %v710, 1.442695
        %v714 = vpow.pop %v713
        %v715 = vmul.f32 %v688, %v712
        %v716 = vmul.f32 %v689, %v714
        %v717 = vsel %vm629, %v715, 0.0
        %v718 = vsel %vm629, %v716, 0.0
        %v719 = vadd.f32 %v717, %v718
        %720 = vadd.xlane.f32.xlu0 %v719
        %v721 = vpop.xlane.xlu0 %720
        %v722 = vrot.slane %v721, 4
        %v723 = vadd.f32 %v721, %v722
        %v724 = vrot.slane %v723, 2
        %v725 = vadd.f32 %v723, %v724
        %v726 = vrot.slane %v725, 1
        %v727 = vadd.f32 %v725, %v726
        %s728 = vtos %v727
        %v729 = vstv %s728
        %v730 = vsel %vm629, %v712, 0.0
        %v731 = vsel %vm629, %v714, 0.0
        %v732 = vadd.f32 %v730, %v731
        %733 = vadd.xlane.f32.xlu0 %v732
        %v734 = vpop.xlane.xlu0 %733
        %v735 = vrot.slane %v734, 4
        %v736 = vadd.f32 %v734, %v735
        %v737 = vrot.slane %v736, 2
        %v738 = vadd.f32 %v736, %v737
        %v739 = vrot.slane %v738, 1
        %v740 = vadd.f32 %v738, %v739
        %s741 = vtos %v740
        %v742 = vstv %s741
        %v743 = vsel %vm629, %v701, 0.0
        %v744 = vsel %vm629, %v708, 0.0
        %v745 = vadd.f32 %v743, %v744
        %746 = vadd.xlane.f32.xlu0 %v745
        %v747 = vpop.xlane.xlu0 %746
        %v748 = vrot.slane %v747, 4
        %v749 = vadd.f32 %v747, %v748
        %v750 = vrot.slane %v749, 2
        %v751 = vadd.f32 %v749, %v750
        %v752 = vrot.slane %v751, 1
        %v753 = vadd.f32 %v751, %v752
        %s754 = vtos %v753
        %v755 = vstv %s754
        %v756 = vld [vmem:[%s320] sm:$0x1]
        %v757 = vadd.f32 %v756, %v642
        %vm758 = vcmask 0
        %759 = vst.msk [vmem:[%s320] sm:$0x1] %vm758, %v757
        %v760 = vld [vmem:[%s320] sm:$0x1]
        %v761 = vadd.f32 %v760, %v655
        %vm762 = vcmask 8200
        %763 = vst.msk [vmem:[%s320] sm:$0x1] %vm762, %v761
        %v764 = vld [vmem:[%s320] sm:$0x1]
        %v765 = vadd.f32 %v764, %v668
        %vm766 = vcmask 16400
        %767 = vst.msk [vmem:[%s320] sm:$0x1] %vm766, %v765
        %v768 = vld [vmem:[%s320] sm:$0x1]
        %v769 = vadd.f32 %v768, %v729
        %vm770 = vcmask 24600
        %771 = vst.msk [vmem:[%s320] sm:$0x1] %vm770, %v769
        %v772 = vld [vmem:[%s320] sm:$0x1]
        %v773 = vadd.f32 %v772, %v742
        %vm774 = vcmask 32800
        %775 = vst.msk [vmem:[%s320] sm:$0x1] %vm774, %v773
        %v776 = vld [vmem:[%s320] sm:$0x1]
        %v777 = vadd.f32 %v776, %v755
        %vm778 = vcmask 41000
        %779 = vst.msk [vmem:[%s320] sm:$0x1] %vm778, %v777
        %s780 = sand.u32 %s132, 1
        %s781 = scalar_lea.sflag [#allocation4], %s780
        %s782 = sand.u32 %s132, 1
        %s783 = smul.addr %s782, 4
        %s784 = scalar_lea.vmem [#allocation8], %s783
        %s785 = sand.u32 %s158, 1
        %s786 = scalar_lea.sflag [#allocation10], %s785
        %s787 = sand.u32 %s158, 1
        %s788 = scalar_lea.vmem [#allocation9], %s787
        // Predicated region
        $region49: #{tpu_custom_call.1} parent=31 // pred_check
          %p789 = pneg %p142
        $region50: #{tpu_custom_call.1} parent=31 // pred_check_branch
          %791 = sbr.rel (%p789) target = $region52
        $region51: #{tpu_custom_call.1} parent=31 // pred_region
          %s793 = ssub.s32 64, 64
          %794 = vsyncadd %s781, %s793
          %s795 = smul.addr %s32, 64
          %s796 = scalar_lea.hbm %s3, %s795
          %s798 = sshll.u32 %s784, 4
          %s799 = int_to_ptr.vmem [resolvable:$true] %s798
          %801 = dma.vmem_to_hbm [thread:$0]  %s799, 64, %s796, %s781
        $region52: #{tpu_custom_call.1} parent=31 // pred_fallthru
          _
        // Predicated region
        $region53: #{tpu_custom_call.1} parent=31 // pred_check
          %p802 = pneg %p168
        $region54: #{tpu_custom_call.1} parent=31 // pred_check_branch
          %804 = sbr.rel (%p802) target = $region56
        $region55: #{tpu_custom_call.1} parent=31 // pred_region
          %s806 = ssub.s32 16, 16
          %807 = vsyncadd %s786, %s806
          %s808 = smul.addr %s32, 16
          %s809 = scalar_lea.hbm %s4, %s808
          %s811 = sshll.u32 %s788, 4
          %s812 = int_to_ptr.vmem [resolvable:$true] %s811
          %814 = dma.vmem_to_hbm [thread:$0]  %s812, 16, %s809, %s786
        $region56: #{tpu_custom_call.1} parent=31 // pred_fallthru
          _
      $region32: #{tpu_custom_call.1} parent=5 // pred_fallthru
        _
      %p815 = scmp.le.s32.totalorder 2, %s23
      // Predicated region
      $region57: #{tpu_custom_call.1} parent=5 // pred_check
        %p816 = pneg %p815
      $region58: #{tpu_custom_call.1} parent=5 // pred_check_branch
        %818 = sbr.rel (%p816) target = $region60
      $region59: #{tpu_custom_call.1} parent=5 // pred_region
        %s819 = ssub.s32 %s23, 2
        // Predicated region
        $region61: #{tpu_custom_call.1} parent=59 // pred_check
          %p820 = pneg %p148
        $region62: #{tpu_custom_call.1} parent=59 // pred_check_branch
          %822 = sbr.rel (%p820) target = $region64
        $region63: #{tpu_custom_call.1} parent=59 // pred_region
          %s823 = sand.u32 %s133, 1
          %s824 = scalar_lea.sflag [#allocation4], %s823
          %s825 = sand.u32 %s133, 1
          %s826 = smul.addr %s825, 4
          %s827 = scalar_lea.vmem [#allocation8], %s826
          %828 = dma.done %s824, 64
        $region64: #{tpu_custom_call.1} parent=59 // pred_fallthru
          _
        // Predicated region
        $region65: #{tpu_custom_call.1} parent=59 // pred_check
          %p829 = pneg %p174
        $region66: #{tpu_custom_call.1} parent=59 // pred_check_branch
          %831 = sbr.rel (%p829) target = $region68
        $region67: #{tpu_custom_call.1} parent=59 // pred_region
          %s832 = sand.u32 %s159, 1
          %s833 = scalar_lea.sflag [#allocation10], %s832
          %s834 = sand.u32 %s159, 1
          %s835 = scalar_lea.vmem [#allocation9], %s834
          %836 = dma.done %s833, 16
        $region68: #{tpu_custom_call.1} parent=59 // pred_fallthru
          _
      $region60: #{tpu_custom_call.1} parent=5 // pred_fallthru
        _
    $region6: #{tpu_custom_call.1} parent=1 // loop_footer
      %s27 = sadd.s32 1, %s23
    $region7: #{tpu_custom_call.1} parent=1 // loop_footer_branch
      %22 = sbr.rel target = $region3
    $region8: #{tpu_custom_call.1} parent=1 // loop_exit
      _
    %837 = vsyncpa [#allocation3], 1
    %s838 = scalar_lea.sflag [#allocation3], 1
    %839 = vsyncpa %s838, 1
    %840 = vsyncpa [#allocation6], 1
    %s841 = scalar_lea.sflag [#allocation6], 1
    %842 = vsyncpa %s841, 1
    %843 = vsyncpa [#allocation4], 1
    %s844 = scalar_lea.sflag [#allocation4], 1
    %845 = vsyncpa %s844, 1
    %846 = vsyncpa [#allocation10], 1
    %s847 = scalar_lea.sflag [#allocation10], 1
    %848 = vsyncpa %s847, 1

</llo_original>
